<compile_context>
chip_gen: v6e
topology: v6e:2x2x1
jax: 0.10.0
libtpu: 0.0.40
codegen_flags: <defaults>
</compile_context>

<pallas_src>
import functools

import jax
import jax.numpy as jnp
from jax.experimental import pallas as pl
from jax.experimental.pallas import tpu as pltpu


def _round_up(v, m):
    return ((v + m - 1) // m) * m


def _drop_path_kernel(scale_ref, x_ref, o_ref):
    # scale_ref: VMEM (TB, 1) f32 per-sample scale, broadcast along lanes.
    # x_ref / o_ref: VMEM (TB, TN) tiles of the flattened activation.
    o_ref[...] = (x_ref[...].astype(jnp.float32) * scale_ref[...]).astype(o_ref.dtype)


_TILE_BYTES = 4 * 1024 * 1024        # target bytes per x tile (~4 MiB; fits all gens)
_TB_CAP = 1024                        # cap on batch-dim tile (multiple of 8/16/32)
_PALLAS_MIN_BYTES = 4 * 1024 * 1024   # below ~4 MiB a fused XLA multiply wins


@functools.partial(jax.jit,
                   static_argnames=("drop_prob", "training", "force_pallas"))
def drop_path(x, key, drop_prob=None, training=False, force_pallas=False):
    """JAX/Pallas equivalent of the PyTorch drop_path forward."""
    if drop_prob is None or drop_prob == 0.0 or not training:
        return x

    B = x.shape[0]
    keep_prob = 1.0 - float(drop_prob)

    if keep_prob <= 0.0:
        # Every path dropped: exact zeros (avoids the 0/0 -> NaN of the naive formula).
        return jnp.zeros_like(x)

    # Per-sample keep mask (tiny RNG glue, plain JAX).  Scale kept in f32 so
    # 1/keep_prob does not lose precision for bf16 / low-precision activations.
    keep = jax.random.bernoulli(key, p=keep_prob, shape=(B,))
    scale = keep.astype(jnp.float32) / jnp.float32(keep_prob)          # (B,) f32

    nbytes = x.size * x.dtype.itemsize
    if nbytes < _PALLAS_MIN_BYTES and not force_pallas:
        # Small / mid-sized activations: XLA fuses the broadcast multiply at
        # HBM roofline; pallas_call launch + per-step overhead would lose.
        bshape = (B,) + (1,) * (x.ndim - 1)
        return (x.astype(jnp.float32) * scale.reshape(bshape)).astype(x.dtype)

    flat = x.reshape(B, -1)
    N = flat.shape[1]
    scale_col = scale.reshape(B, 1)
    itemsize = x.dtype.itemsize

    # Sublane packing multiple per dtype: f32 -> 8, bf16 -> 16, 8-bit -> 32.
    sub = max(8, 32 // itemsize)
    tb = min(_round_up(B, sub), _TB_CAP)

    # Lane-dim tile from the per-tile byte budget (dtype-aware), multiple of 128.
    n_pad = _round_up(N, 128)
    tn = (_TILE_BYTES // (tb * itemsize)) // 128 * 128
    tn = max(128, min(tn, n_pad))

    gi = pl.cdiv(B, tb)
    gj = pl.cdiv(N, tn)
    # v7x has 2 TensorCores: guarantee >= 2 grid steps (balanced halves on N)
    # whenever the batch axis yields only a single block.
    if gi == 1 and gj == 1 and n_pad >= 256:
        tn = _round_up(pl.cdiv(n_pad, 2), 128)
        gj = pl.cdiv(N, tn)
    grid = (gi, gj)

    out = pl.pallas_call(
        _drop_path_kernel,
        out_shape=jax.ShapeDtypeStruct((B, N), x.dtype),
        grid_spec=pltpu.PrefetchScalarGridSpec(
            num_scalar_prefetch=0,
            grid=grid,
            in_specs=[
                # j-invariant index_map: scale column DMA'd once per i-block.
                pl.BlockSpec((tb, 1), lambda i, j: (i, 0)),
                pl.BlockSpec((tb, tn), lambda i, j: (i, j)),
            ],
            out_specs=pl.BlockSpec((tb, tn), lambda i, j: (i, j)),
        ),
        # No input_output_aliases: x is not donated at the jit boundary, so
        # aliasing would force a hidden defensive copy (2x HBM traffic).
        compiler_params=pltpu.CompilerParams(
            dimension_semantics=("parallel", "parallel"),
            vmem_limit_bytes=48 * 1024 * 1024,
        ),
    )(scale_col, flat)

    return out.reshape(x.shape)


class DropPath:
    """Drop paths (Stochastic Depth) per sample, Pallas-backed."""

    def __init__(self, drop_prob=None):
        self.drop_prob = drop_prob
        self.training = True

    def __call__(self, x, key, force_pallas=False):
        return drop_path(x, key, drop_prob=self.drop_prob,
                         training=self.training, force_pallas=force_pallas)


if __name__ == "__main__":
    key = jax.random.PRNGKey(0)
    k_x, k_mask, k_x2 = jax.random.split(key, 3)

    # Small NCHW input consistent with a conv/transformer residual branch.
    B, C, H, W = 2, 4, 16, 16
    x = jax.random.normal(k_x, (B, C, H, W), dtype=jnp.float32)

    module = DropPath(drop_prob=0.3)
    module.training = True

    # Pallas path (forced so the kernel actually runs at this small size).
    y = jax.block_until_ready(module(x, k_mask, force_pallas=True))

    # Pure-JAX reference.
    keep_prob = 1.0 - 0.3
    keep = jax.random.bernoulli(k_mask, p=keep_prob, shape=(B,))
    scale = keep.astype(jnp.float32) / jnp.float32(keep_prob)
    y_ref = x * scale.reshape(B, 1, 1, 1)
    assert y.shape == x.shape and y.dtype == x.dtype
    assert jnp.allclose(y, y_ref, atol=1e-6), "pallas path mismatch vs reference"

    # Small-input fused-XLA fallback path must match too.
    y_small = jax.block_until_ready(module(x, k_mask))
    assert jnp.allclose(y_small, y_ref, atol=1e-6), "fallback path mismatch"

    # Non-aligned shapes: B not a multiple of 8, flattened N not a multiple of
    # 128 (exercises Pallas partial-tile masking on both axes).
    x_odd = jax.random.normal(k_x2, (3, 5, 7, 13), dtype=jnp.float32)
    y_odd = jax.block_until_ready(
        drop_path(x_odd, k_mask, drop_prob=0.3, training=True, force_pallas=True))
    keep_odd = jax.random.bernoulli(k_mask, p=keep_prob, shape=(3,))
    scale_odd = keep_odd.astype(jnp.float32) / jnp.float32(keep_prob)
    y_odd_ref = x_odd * scale_odd.reshape(3, 1, 1, 1)
    assert jnp.allclose(y_odd, y_odd_ref, atol=1e-6), "odd-shape pallas mismatch"

    # bf16: scale stays f32, multiply in f32, cast at the store.
    xb = x.astype(jnp.bfloat16)
    yb = jax.block_until_ready(
        drop_path(xb, k_mask, drop_prob=0.3, training=True, force_pallas=True))
    yb_ref = (xb.astype(jnp.float32) * scale.reshape(B, 1, 1, 1)).astype(jnp.bfloat16)
    assert yb.dtype == jnp.bfloat16
    assert jnp.allclose(yb.astype(jnp.float32), yb_ref.astype(jnp.float32),
                        atol=1e-2, rtol=1e-2), "bf16 pallas path mismatch"

    # Eval mode is identity.
    module.training = False
    y_eval = jax.block_until_ready(module(x, k_mask))
    assert jnp.array_equal(y_eval, x)
    module.training = True

    # drop_prob >= 1 -> exact zeros (no 0/0 NaN).
    all_drop = jax.block_until_ready(
        drop_path(x, k_mask, drop_prob=1.0, training=True, force_pallas=True))
    assert jnp.array_equal(all_drop, jnp.zeros_like(x))

    print("KERNEL_OK")
</pallas_src>

<mosaic_0001>
module attributes {stable_mosaic.version = 11 : i64} {
  func.func @_drop_path_kernel(%arg0: i32, %arg1: i32, %arg2: memref<8x1xf32, #tpu.memory_space<vmem>>, %arg3: memref<8x512xf32, #tpu.memory_space<vmem>>, %arg4: memref<8x512xf32, #tpu.memory_space<vmem>>) attributes {dimension_semantics = [#tpu.dimension_semantics<parallel>, #tpu.dimension_semantics<parallel>], iteration_bounds = array<i64: 1, 2>, scalar_prefetch = 0 : i64, scratch_operands = 0 : i64, tpu.core_type = #tpu.core_type<tc>, window_params = [{transform_indices = @transform_0, window_bounds = array<i64: 8, 1>}, {transform_indices = @transform_1, window_bounds = array<i64: 8, 512>}, {transform_indices = @transform_2, window_bounds = array<i64: 8, 512>}]} {
    %c0 = arith.constant 0 : index
    %c0_0 = arith.constant 0 : index
    %0 = vector.load %arg3[%c0, %c0_0] : memref<8x512xf32, #tpu.memory_space<vmem>>, vector<8x512xf32>
    %c0_1 = arith.constant 0 : index
    %c0_2 = arith.constant 0 : index
    %1 = vector.load %arg2[%c0_1, %c0_2] : memref<8x1xf32, #tpu.memory_space<vmem>>, vector<8x1xf32>
    %2 = vector.broadcast %1 : vector<8x1xf32> to vector<8x512xf32>
    %3 = arith.mulf %0, %2 : vector<8x512xf32>
    %c0_3 = arith.constant 0 : index
    %c0_4 = arith.constant 0 : index
    %4 = vector.load %arg4[%c0_3, %c0_4] : memref<8x512xf32, #tpu.memory_space<vmem>>, vector<8x512xf32>
    tpu.vector_store %arg4[%c0_3, %c0_4], %3 {strides = array<i32>} : memref<8x512xf32, #tpu.memory_space<vmem>>, vector<8x512xf32>,
    return
  }
  func.func @transform_0(%arg0: i32, %arg1: i32) -> (i32, i32) {
    %c0_i32 = arith.constant 0 : i32
    %c0_i32_0 = arith.constant 0 : i32
    return %arg0, %c0_i32 : i32, i32
  }
  func.func @transform_1(%arg0: i32, %arg1: i32) -> (i32, i32) {
    %c0_i32 = arith.constant 0 : i32
    return %arg0, %arg1 : i32, i32
  }
  func.func @transform_2(%arg0: i32, %arg1: i32) -> (i32, i32) {
    %c0_i32 = arith.constant 0 : i32
    return %arg0, %arg1 : i32, i32
  }
}

</mosaic_0001>

<llo_original>
// kernel: drop_path.1
$region0: #{drop_path.1}
  #allocation0 [shape = 'u32[]', space=smem, size = 0x4, offset = 0x4, fixed_abs, tag = 'smem constant byte address 0x4 - core index']
  #allocation1 [shape = 'u32[144,128]{1,0:T(1,128)}', space=vmem, size = 0x12000, scoped, tag = 'internal scratch']
  %s0 = inlined_call_operand.vmem [shape: f32[2,1], index: 0, kind: input, shape index: {}]
  %s1 = inlined_call_operand.vmem [shape: f32[2,1024], index: 1, kind: input, shape index: {}]
  %s2 = inlined_call_operand.vmem [shape: f32[2,1024], index: 2, kind: output, shape index: {}]
  %s3 = sld [smem:[#allocation0]]
  $region113: #{drop_path.1} parent=0
    _
  %s5 = ssub.s32 1, %s3
  %s6 = scalar_select 0, %s5, %s3
  $region1: #{drop_path.1} parent=0
    #allocation2 [shape = 'u8[32768]{0}', space=vmem, size = 0x8000, scoped, tag = 'input window, operand 1']
    #allocation3 [shape = 'u8[32768]{0}', space=vmem, size = 0x8000, scoped, tag = 'output window, operand 0']
    loop: start=0, step=1, limit=4
    $region2: #{drop_path.1} parent=1 // loop_pre_header
      _
    $region3: #{drop_path.1} parent=1 // loop_header
      %s8 = sphi 0, %s12
      %p9 = scmp.ge.s32.totalorder %s8, 4
      %s15 = sphi 0, %s27
      %s16 = sphi 0, %s23
      %s17 = sphi 0, %s15
      %s18 = sphi 0, %s16
      %s19 = sphi 0, %s17
      %s20 = sphi 0, %s18
      %s30 = sphi 0, %s32
      %s33 = sphi 0, %s30
      %s34 = sphi 0, %s33
      %s50 = sphi 0, %s34
      %s58 = sphi 0, %s60
      %s61 = sphi 0, %s58
      %s62 = sphi 0, %s61
      %s78 = sphi 0, %s62
      %s86 = sphi 0, %s88
      %s89 = sphi 0, %s86
      %s90 = sphi 0, %s89
      %s106 = sphi 0, %s90
    $region4: #{drop_path.1} parent=1 // loop_header_branch
      %11 = sbr.rel (%p9) target = $region8
    $region5: #{drop_path.1} parent=1 // loop_body
      %s13 = ssub.s32 %s8, 1
      %s14 = ssub.s32 %s8, 2
      %s21 = sadd.s32 1, %s16
      %p22 = scmp.ge.s32.totalorder %s21, 2
      %s23 = scalar_select %p22, 0, %s21
      %s24 = sadd.s32 1, %s15
      %s25 = scalar_select %p22, %s24, %s15
      %p26 = scmp.ge.s32.totalorder %s25, 1
      %s27 = scalar_select %p26, 0, %s25
      %s28 = ssub.s32 %s15, %s27
      %p29 = scmp.eq.s32.totalorder %s28, 0
      %s31 = sadd.s32 %s30, 1
      %s32 = scalar_select %p29, %s30, %s31
      %p35 = pneg %p29
      %p36 = scmp.eq.s32.totalorder %s8, 1
      %p37 = por %p35, %p36
      %p38 = scmp.ne.s32.totalorder %s30, %s33
      %p39 = scmp.eq.s32.totalorder %s8, 0
      %p40 = por %p38, %p39
      %p41 = scmp.ne.s32.totalorder %s30, %s33
      %p42 = scmp.eq.s32.totalorder %s13, 1
      %p43 = por %p41, %p42
      %p44 = scmp.ne.s32.totalorder %s33, %s34
      %p45 = scmp.eq.s32.totalorder %s13, 0
      %p46 = por %p44, %p45
      %p47 = scmp.ne.s32.totalorder %s33, %s34
      %p48 = scmp.eq.s32.totalorder %s14, 1
      %p49 = por %p47, %p48
      %p51 = scmp.ne.s32.totalorder %s34, %s50
      %p52 = scmp.eq.s32.totalorder %s14, 0
      %p53 = por %p51, %p52
      %s54 = ssub.s32 %s15, %s27
      %s55 = ssub.s32 %s16, %s23
      %s56 = sor.u32 %s54, %s55
      %p57 = scmp.eq.s32.totalorder %s56, 0
      %s59 = sadd.s32 %s58, 1
      %s60 = scalar_select %p57, %s58, %s59
      %p63 = pneg %p57
      %p64 = scmp.eq.s32.totalorder %s8, 1
      %p65 = por %p63, %p64
      %p66 = scmp.ne.s32.totalorder %s58, %s61
      %p67 = scmp.eq.s32.totalorder %s8, 0
      %p68 = por %p66, %p67
      %p69 = scmp.ne.s32.totalorder %s58, %s61
      %p70 = scmp.eq.s32.totalorder %s13, 1
      %p71 = por %p69, %p70
      %p72 = scmp.ne.s32.totalorder %s61, %s62
      %p73 = scmp.eq.s32.totalorder %s13, 0
      %p74 = por %p72, %p73
      %p75 = scmp.ne.s32.totalorder %s61, %s62
      %p76 = scmp.eq.s32.totalorder %s14, 1
      %p77 = por %p75, %p76
      %p79 = scmp.ne.s32.totalorder %s62, %s78
      %p80 = scmp.eq.s32.totalorder %s14, 0
      %p81 = por %p79, %p80
      %s82 = ssub.s32 %s15, %s27
      %s83 = ssub.s32 %s16, %s23
      %s84 = sor.u32 %s82, %s83
      %p85 = scmp.eq.s32.totalorder %s84, 0
      %s87 = sadd.s32 %s86, 1
      %s88 = scalar_select %p85, %s86, %s87
      %p91 = pneg %p85
      %p92 = scmp.eq.s32.totalorder %s8, 1
      %p93 = por %p91, %p92
      %p94 = scmp.ne.s32.totalorder %s86, %s89
      %p95 = scmp.eq.s32.totalorder %s8, 0
      %p96 = por %p94, %p95
      %p97 = scmp.ne.s32.totalorder %s86, %s89
      %p98 = scmp.eq.s32.totalorder %s13, 1
      %p99 = por %p97, %p98
      %p100 = scmp.ne.s32.totalorder %s89, %s90
      %p101 = scmp.eq.s32.totalorder %s13, 0
      %p102 = por %p100, %p101
      %p103 = scmp.ne.s32.totalorder %s89, %s90
      %p104 = scmp.eq.s32.totalorder %s14, 1
      %p105 = por %p103, %p104
      %p107 = scmp.ne.s32.totalorder %s90, %s106
      %p108 = scmp.eq.s32.totalorder %s14, 0
      %p109 = por %p107, %p108
      %p110 = scmp.le.s32.totalorder 1, %s8
      %p111 = scmp.lt.s32.totalorder %s8, 3
      %p112 = pnand %p110, %p111
      %p113 = pneg %p112
      // Predicated region
      $region9: #{drop_path.1} parent=5 // pred_check
        _
      $region10: #{drop_path.1} parent=5 // pred_check_branch
        %115 = sbr.rel (%p112) target = $region12
      $region11: #{drop_path.1} parent=5 // pred_region
        %s116 = ssub.s32 %s8, 1
        // Predicated region
        $region13: #{drop_path.1} parent=11 // pred_check
          %p117 = pneg %p46
        $region14: #{drop_path.1} parent=11 // pred_check_branch
          %119 = sbr.rel (%p117) target = $region16
        $region15: #{drop_path.1} parent=11 // pred_region
          %s120 = smul.u32 4, %s17
          %s121 = ssub.s32 1, %s120
          %s122 = smul.u32 32, %s121
          %p123 = scmp.lt.s32.totalorder %s120, 0
          %s124 = scalar_select %p123, %s120, 0
          %s125 = smul.addr %s124, 2
          %s126 = scalar_lea.vmem %s0, %s125
          %s127 = smul.u32 4, %s17
          %s128 = ssub.s32 1, %s127
          %s129 = smul.u32 32, %s128
        $region16: #{drop_path.1} parent=11 // pred_fallthru
          _
      $region12: #{drop_path.1} parent=5 // pred_fallthru
        _
      %p130 = scmp.lt.s32.totalorder %s8, 2
      // Predicated region
      $region17: #{drop_path.1} parent=5 // pred_check
        %p131 = pneg %p130
      $region18: #{drop_path.1} parent=5 // pred_check_branch
        %133 = sbr.rel (%p131) target = $region20
      $region19: #{drop_path.1} parent=5 // pred_region
        // Predicated region
        $region21: #{drop_path.1} parent=19 // pred_check
          %p134 = pneg %p68
        $region22: #{drop_path.1} parent=19 // pred_check_branch
          %136 = sbr.rel (%p134) target = $region24
        $region23: #{drop_path.1} parent=19 // pred_region
          %s137 = sand.u32 %s58, 1
          %s138 = sand.u32 %s58, 1
          %s139 = smul.addr %s138, 32
          %s140 = scalar_lea.vmem [#allocation2], %s139
          %s141 = smul.u32 4, %s15
          %s142 = smul.u32 4, %s16
          %s143 = ssub.s32 1, %s141
          %s144 = smul.u32 32, %s143
          %s145 = smul.u32 %s144, 4
          %p146 = scmp.ne.s32.totalorder 0, %s145
          %s147 = smul.addr %s141, 8
          %s148 = sadd.s32 %s142, %s147
          %s149 = smul.addr %s148, 2
          %s150 = scalar_lea.vmem %s1, %s149
          // Predicated region
          $region25: #{drop_path.1} parent=23 // pred_check
            %p151 = pneg %p146
          $region26: #{drop_path.1} parent=23 // pred_check_branch
            %153 = sbr.rel (%p151) target = $region28
          $region27: #{drop_path.1} parent=23 // pred_region
            // Predicated region
            $region29: #{drop_path.1} parent=27 // pred_check
              _
            $region30: #{drop_path.1} parent=27 // pred_check_branch
              %155 = sbr.rel (0) target = $region32
            $region31: #{drop_path.1} parent=27 // pred_region
              // Predicated region
              $region44: #{drop_path.1} parent=31 // pred_check
                _
              $region45: #{drop_path.1} parent=31 // pred_check_branch
                %179 = sbr.rel (0) target = $region47
              $region46: #{drop_path.1} parent=31 // pred_region
                // While loop
                $region48: #{drop_path.1} parent=46 // loop_pre_header
                  _
                $region49: #{drop_path.1} parent=46 // loop_header
                  %s181 = sphi 0, %s183
                  %p182 = scmp.ge.s32.totalorder %s181, %s143
                  %s186 = sphi 0, %s193
                  %s187 = sphi %s150, %s196
                  %s188 = sphi %s140, %s197
                $region50: #{drop_path.1} parent=46 // loop_header_branch
                  %185 = sbr.rel (%p182) target = $region54
                $region51: #{drop_path.1} parent=46 // loop_body
                  %v189 = vld [vmem:[%s187] sm:$0xff]
                  %190 = vst [vmem:[%s188] sm:$0xff] %v189
                  %s191 = sadd.s32 1, %s186
                  %p192 = scmp.ge.s32.totalorder %s191, %s143
                  %s193 = scalar_select %p192, 0, %s191
                  %s194 = smul.u32 %s193, 16
                  %s195 = smul.u32 %s193, 8
                  %s196 = scalar_lea.vmem %s150, %s194
                  %s197 = scalar_lea.vmem %s140, %s195 [#allocation2]
                $region52: #{drop_path.1} parent=46 // loop_footer
                  %s183 = sadd.s32 %s181, 1
                $region53: #{drop_path.1} parent=46 // loop_footer_branch
                  %180 = sbr.rel target = $region49
                $region54: #{drop_path.1} parent=46 // loop_exit
                  _
              $region47: #{drop_path.1} parent=31 // pred_fallthru
                _
              // Predicated region
              $region55: #{drop_path.1} parent=31 // pred_check
                _
              $region56: #{drop_path.1} parent=31 // pred_check_branch
                %199 = sbr.rel target = $region58
              $region57: #{drop_path.1} parent=31 // pred_region
                _
              $region58: #{drop_path.1} parent=31 // pred_fallthru
                _
            $region32: #{drop_path.1} parent=27 // pred_fallthru
              _
            // Predicated region
            $region33: #{drop_path.1} parent=27 // pred_check
              _
            $region34: #{drop_path.1} parent=27 // pred_check_branch
              %157 = sbr.rel target = $region36
            $region35: #{drop_path.1} parent=27 // pred_region
              %s159 = ssub.s32 256, 1
              // While loop
              $region37: #{drop_path.1} parent=35 // loop_pre_header
                _
              $region38: #{drop_path.1} parent=35 // loop_header
                %s161 = sphi 0, %s163
                %p162 = scmp.ge.s32.totalorder %s161, %s143
                %s166 = sphi 0, %s173
                %s167 = sphi %s150, %s176
                %s168 = sphi %s140, %s177
              $region39: #{drop_path.1} parent=35 // loop_header_branch
                %165 = sbr.rel (%p162) target = $region43
              $region40: #{drop_path.1} parent=35 // loop_body
                %v169 = vld [vmem:[%s167] sm:%s159]
                %170 = vst [vmem:[%s168] sm:%s159] %v169
                %s171 = sadd.s32 1, %s166
                %p172 = scmp.ge.s32.totalorder %s171, %s143
                %s173 = scalar_select %p172, 0, %s171
                %s174 = smul.u32 %s173, 16
                %s175 = smul.u32 %s173, 8
                %s176 = scalar_lea.vmem %s150, %s174
                %s177 = scalar_lea.vmem %s140, %s175 [#allocation2]
              $region41: #{drop_path.1} parent=35 // loop_footer
                %s163 = sadd.s32 %s161, 1
              $region42: #{drop_path.1} parent=35 // loop_footer_branch
                %160 = sbr.rel target = $region38
              $region43: #{drop_path.1} parent=35 // loop_exit
                _
            $region36: #{drop_path.1} parent=27 // pred_fallthru
              _
          $region28: #{drop_path.1} parent=23 // pred_fallthru
            _
          %200 = vnop
        $region24: #{drop_path.1} parent=19 // pred_fallthru
          _
      $region20: #{drop_path.1} parent=5 // pred_fallthru
        _
      %p201 = scmp.le.s32.totalorder 1, %s8
      %p202 = scmp.lt.s32.totalorder %s8, 3
      %p203 = pnand %p201, %p202
      %p204 = pneg %p203
      // Predicated region
      $region59: #{drop_path.1} parent=5 // pred_check
        _
      $region60: #{drop_path.1} parent=5 // pred_check_branch
        %206 = sbr.rel (%p203) target = $region62
      $region61: #{drop_path.1} parent=5 // pred_region
        %s207 = ssub.s32 %s8, 1
        %s208 = sand.u32 %s61, 1
        %s209 = sand.u32 %s61, 1
        %s210 = smul.addr %s209, 32
        %s211 = scalar_lea.vmem [#allocation2], %s210
        // Predicated region
        $region63: #{drop_path.1} parent=61 // pred_check
          %p212 = pneg %p74
        $region64: #{drop_path.1} parent=61 // pred_check_branch
          %214 = sbr.rel (%p212) target = $region66
        $region65: #{drop_path.1} parent=61 // pred_region
          _
        $region66: #{drop_path.1} parent=61 // pred_fallthru
          _
        %s215 = smul.u32 4, %s17
        %s216 = ssub.s32 1, %s215
        %s217 = smul.u32 32, %s216
        %p218 = scmp.lt.s32.totalorder %s215, 0
        %s219 = scalar_select %p218, %s215, 0
        %s220 = smul.addr %s219, 2
        %s221 = scalar_lea.vmem %s0, %s220
        %p222 = pneg %p46
        %p223 = pneg %p43
        %s224 = sand.u32 %s61, 1
        %s225 = sand.u32 %s61, 1
        %s226 = smul.addr %s225, 32
        %s227 = scalar_lea.vmem [#allocation2], %s226
        %p228 = pneg %p74
        %p229 = pneg %p71
        %p230 = pneg %p102
        %p231 = pneg %p99
        %s232 = sand.u32 %s89, 1
        %s233 = sand.u32 %s89, 1
        %s234 = smul.addr %s233, 32
        %s235 = scalar_lea.vmem [#allocation3], %s234
        %s236 = smul.u32 4, %s17
        %s237 = ssub.s32 1, %s236
        %s238 = smul.u32 32, %s237
        %p239 = scmp.lt.s32.totalorder %s236, 0
        %s240 = scalar_select %p239, %s236, 0
        %s241 = smul.addr %s240, 2
        %s242 = scalar_lea.vmem %s0, %s241
        %s243 = smul.u32 4, %s17
        %s244 = ssub.s32 1, %s243
        %s245 = smul.u32 32, %s244
        %s246 = smul.u32 4, %s17
        %s247 = smul.u32 4, %s18
        %s248 = ssub.s32 1, %s246
        %s249 = smul.u32 32, %s248
        %s250 = smul.u32 %s249, 4
        %s251 = smul.u32 4, %s17
        %s252 = smul.u32 4, %s18
        %s253 = ssub.s32 1, %s251
        %s254 = smul.u32 32, %s253
        %s255 = smul.u32 %s254, 4
        %v256 = vld [vmem:[%s211] sm:$0xff]
        %v257 = vld [vmem:[%s211 + $0x8] sm:$0xff]
        %v258 = vld [vmem:[%s211 + $0x10] sm:$0xff]
        %v259 = vld [vmem:[%s211 + $0x18] sm:$0xff]
        %v260 = vld [vmem:[%s242] sm:$0xff]
        %262 = vset.pattern.permute.xlu0 0
        %263 = vperm.xlu0 %262, %v260
        %v264 = vpop.permute.xlu0 %263
        %v266 = vunpack.c.l.s4 269488144
        %v267 = vunpack.c.0.s8 %v266
        %v268 = vlaneseq
        %v269 = vshrl.u32 %v268, 7
        %v270 = vsub.s32 %v267, %v269
        %v271 = vrot.slane %v264, %v270
        %v273 = vunpack.c.l.s4 842150450
        %v274 = vunpack.c.0.s8 %v273
        %v275 = vlaneseq
        %v276 = vshrl.u32 %v275, 7
        %v277 = vsub.s32 %v274, %v276
        %v278 = vrot.slane %v264, %v277
        %v280 = vunpack.c.l.s4 1414812756
        %v281 = vunpack.c.0.s8 %v280
        %v282 = vlaneseq
        %v283 = vshrl.u32 %v282, 7
        %v284 = vsub.s32 %v281, %v283
        %v285 = vrot.slane %v264, %v284
        %v287 = vunpack.c.l.s4 1987475062
        %v288 = vunpack.c.0.s8 %v287
        %v289 = vlaneseq
        %v290 = vshrl.u32 %v289, 7
        %v291 = vsub.s32 %v288, %v290
        %v292 = vrot.slane %v264, %v291
        %v297 = vmul.f32 %v256, %v271
        %v298 = vmul.f32 %v257, %v278
        %v299 = vmul.f32 %v258, %v285
        %v300 = vmul.f32 %v259, %v292
        %301 = vst [vmem:[%s235] sm:$0xff] %v297
        %302 = vst [vmem:[%s235 + $0x8] sm:$0xff] %v298
        %303 = vst [vmem:[%s235 + $0x10] sm:$0xff] %v299
        %304 = vst [vmem:[%s235 + $0x18] sm:$0xff] %v300
        %s305 = sand.u32 %s89, 1
        %s306 = sand.u32 %s89, 1
        %s307 = smul.addr %s306, 32
        %s308 = scalar_lea.vmem [#allocation3], %s307
        // Predicated region
        $region67: #{drop_path.1} parent=61 // pred_check
          %p309 = pneg %p99
        $region68: #{drop_path.1} parent=61 // pred_check_branch
          %311 = sbr.rel (%p309) target = $region70
        $region69: #{drop_path.1} parent=61 // pred_region
          %s312 = smul.u32 4, %s17
          %s313 = smul.u32 4, %s18
          %s314 = ssub.s32 1, %s312
          %s315 = smul.u32 32, %s314
          %s316 = smul.u32 %s315, 4
          %p317 = scmp.ne.s32.totalorder 0, %s316
          %s318 = smul.addr %s312, 8
          %s319 = sadd.s32 %s313, %s318
          %s320 = smul.addr %s319, 2
          %s321 = scalar_lea.vmem %s2, %s320
          // Predicated region
          $region71: #{drop_path.1} parent=69 // pred_check
            %p322 = pneg %p317
          $region72: #{drop_path.1} parent=69 // pred_check_branch
            %324 = sbr.rel (%p322) target = $region74
          $region73: #{drop_path.1} parent=69 // pred_region
            // Predicated region
            $region75: #{drop_path.1} parent=73 // pred_check
              _
            $region76: #{drop_path.1} parent=73 // pred_check_branch
              %326 = sbr.rel (0) target = $region78
            $region77: #{drop_path.1} parent=73 // pred_region
              // Predicated region
              $region90: #{drop_path.1} parent=77 // pred_check
                _
              $region91: #{drop_path.1} parent=77 // pred_check_branch
                %350 = sbr.rel (0) target = $region93
              $region92: #{drop_path.1} parent=77 // pred_region
                // While loop
                $region94: #{drop_path.1} parent=92 // loop_pre_header
                  _
                $region95: #{drop_path.1} parent=92 // loop_header
                  %s352 = sphi 0, %s354
                  %p353 = scmp.ge.s32.totalorder %s352, %s314
                  %s357 = sphi 0, %s364
                  %s358 = sphi %s308, %s367
                  %s359 = sphi %s321, %s368
                $region96: #{drop_path.1} parent=92 // loop_header_branch
                  %356 = sbr.rel (%p353) target = $region100
                $region97: #{drop_path.1} parent=92 // loop_body
                  %v360 = vld [vmem:[%s358] sm:$0xff]
                  %361 = vst [vmem:[%s359] sm:$0xff] %v360
                  %s362 = sadd.s32 1, %s357
                  %p363 = scmp.ge.s32.totalorder %s362, %s314
                  %s364 = scalar_select %p363, 0, %s362
                  %s365 = smul.u32 %s364, 8
                  %s366 = smul.u32 %s364, 16
                  %s367 = scalar_lea.vmem %s308, %s365 [#allocation3]
                  %s368 = scalar_lea.vmem %s321, %s366
                $region98: #{drop_path.1} parent=92 // loop_footer
                  %s354 = sadd.s32 %s352, 1
                $region99: #{drop_path.1} parent=92 // loop_footer_branch
                  %351 = sbr.rel target = $region95
                $region100: #{drop_path.1} parent=92 // loop_exit
                  _
              $region93: #{drop_path.1} parent=77 // pred_fallthru
                _
              // Predicated region
              $region101: #{drop_path.1} parent=77 // pred_check
                _
              $region102: #{drop_path.1} parent=77 // pred_check_branch
                %370 = sbr.rel target = $region104
              $region103: #{drop_path.1} parent=77 // pred_region
                _
              $region104: #{drop_path.1} parent=77 // pred_fallthru
                _
            $region78: #{drop_path.1} parent=73 // pred_fallthru
              _
            // Predicated region
            $region79: #{drop_path.1} parent=73 // pred_check
              _
            $region80: #{drop_path.1} parent=73 // pred_check_branch
              %328 = sbr.rel target = $region82
            $region81: #{drop_path.1} parent=73 // pred_region
              %s330 = ssub.s32 256, 1
              // While loop
              $region83: #{drop_path.1} parent=81 // loop_pre_header
                _
              $region84: #{drop_path.1} parent=81 // loop_header
                %s332 = sphi 0, %s334
                %p333 = scmp.ge.s32.totalorder %s332, %s314
                %s337 = sphi 0, %s344
                %s338 = sphi %s308, %s347
                %s339 = sphi %s321, %s348
              $region85: #{drop_path.1} parent=81 // loop_header_branch
                %336 = sbr.rel (%p333) target = $region89
              $region86: #{drop_path.1} parent=81 // loop_body
                %v340 = vld [vmem:[%s338] sm:%s330]
                %341 = vst [vmem:[%s339] sm:%s330] %v340
                %s342 = sadd.s32 1, %s337
                %p343 = scmp.ge.s32.totalorder %s342, %s314
                %s344 = scalar_select %p343, 0, %s342
                %s345 = smul.u32 %s344, 8
                %s346 = smul.u32 %s344, 16
                %s347 = scalar_lea.vmem %s308, %s345 [#allocation3]
                %s348 = scalar_lea.vmem %s321, %s346
              $region87: #{drop_path.1} parent=81 // loop_footer
                %s334 = sadd.s32 %s332, 1
              $region88: #{drop_path.1} parent=81 // loop_footer_branch
                %331 = sbr.rel target = $region84
              $region89: #{drop_path.1} parent=81 // loop_exit
                _
            $region82: #{drop_path.1} parent=73 // pred_fallthru
              _
          $region74: #{drop_path.1} parent=69 // pred_fallthru
            _
          %371 = vnop
        $region70: #{drop_path.1} parent=61 // pred_fallthru
          _
      $region62: #{drop_path.1} parent=5 // pred_fallthru
        _
      %p372 = scmp.le.s32.totalorder 2, %s8
      // Predicated region
      $region105: #{drop_path.1} parent=5 // pred_check
        %p373 = pneg %p372
      $region106: #{drop_path.1} parent=5 // pred_check_branch
        %375 = sbr.rel (%p373) target = $region108
      $region107: #{drop_path.1} parent=5 // pred_region
        %s376 = ssub.s32 %s8, 2
        // Predicated region
        $region109: #{drop_path.1} parent=107 // pred_check
          %p377 = pneg %p105
        $region110: #{drop_path.1} parent=107 // pred_check_branch
          %379 = sbr.rel (%p377) target = $region112
        $region111: #{drop_path.1} parent=107 // pred_region
          %s380 = sand.u32 %s90, 1
          %s381 = sand.u32 %s90, 1
          %s382 = smul.addr %s381, 32
          %s383 = scalar_lea.vmem [#allocation3], %s382
        $region112: #{drop_path.1} parent=107 // pred_fallthru
          _
      $region108: #{drop_path.1} parent=5 // pred_fallthru
        _
    $region6: #{drop_path.1} parent=1 // loop_footer
      %s12 = sadd.s32 1, %s8
    $region7: #{drop_path.1} parent=1 // loop_footer_branch
      %7 = sbr.rel target = $region3
    $region8: #{drop_path.1} parent=1 // loop_exit
      _

</llo_original>
